<compile_context>
chip_gen: v5e
topology: v5e:2x2
jax: 0.10.0
libtpu: 0.0.40
codegen_flags: <defaults>
</compile_context>

<pallas_src>
import functools

import jax
import jax.numpy as jnp
from jax.experimental import pallas as pl
from jax.experimental.pallas import tpu as pltpu


def _cnn_kernel(x_ref, w_ref, b_ref, o_ref, *, C, K):
    # x_ref: (L*C, TB) bf16 -- raw activations, x_ref[t*C + c, b] = x[b, c, t]
    # w_ref: (E, K*C)  bf16 -- folded conv weight, column j = k*C + c
    # b_ref: (E, 1)    f32  -- conv bias
    # o_ref: (E, TB)   f32  -- lane-dense output block (batch on lanes)
    L = x_ref.shape[0] // C
    Lout = L - K + 1
    KC = K * C
    w = w_ref[...]  # (E, K*C)

    # Running max over output positions. Each window is a static sublane slice
    # (start t*C is a Python int, C-aligned); one full-lane-width MXU dot each.
    pooled = jnp.dot(w, x_ref[0:KC, :], preferred_element_type=jnp.float32)  # (E, TB)
    for t in range(1, Lout):  # static unroll; Lout = mWord - 4 (small)
        xt = x_ref[t * C: t * C + KC, :]
        pooled = jnp.maximum(
            pooled, jnp.dot(w, xt, preferred_element_type=jnp.float32)
        )

    # Bias + ReLU once, after the pool (mathematically identical to per-t).
    pooled = jnp.maximum(pooled + b_ref[...], 0.0)
    o_ref[...] = pooled.astype(o_ref.dtype)


def _round_up(a, m):
    return ((a + m - 1) // m) * m


def _pick_tb(b_pad, tb_max):
    """Largest 128-multiple TB <= tb_max that divides b_pad; prefer >=2 grid
    steps (v7x dual TensorCore).  b_pad is already a multiple of 128."""
    best = None          # largest exact divisor
    best_multi = None    # largest exact divisor giving >= 2 grid steps
    tb = 128
    while tb <= min(tb_max, b_pad):
        if b_pad % tb == 0:
            best = tb
            if b_pad // tb >= 2:
                best_multi = tb
        tb += 128
    if best_multi is not None:
        return best_multi
    if best is not None:
        return best
    return b_pad


def cnn_forward(x, weight, bias, *, tb_max=2048):
    """x: (B, eChar, mWord) f32; weight: (eWord, eChar, 5); bias: (eWord,).

    Returns (B, eWord), matching the PyTorch module's forward.
    """
    B, C, L = x.shape
    E, Cw, K = weight.shape
    assert Cw == C
    Lout = L - K + 1
    assert Lout >= 1
    KC = K * C

    # --- wrapper-side layout plumbing (cheap, no data duplication) -----------
    # Raw activations as (L*C, B): row index l*C + c  <->  x[b, c, l].
    x_lc = jnp.transpose(x, (2, 1, 0)).reshape(L * C, B)
    # weight (E, C, K) -> (E, K*C) with column index j = k*C + c.
    w2 = jnp.transpose(weight, (0, 2, 1)).reshape(E, KC)

    # bf16 inputs halve DMA bytes and are native MXU width; accumulation and
    # all elementwise math stay in f32.
    x_lc = x_lc.astype(jnp.bfloat16)
    w2 = w2.astype(jnp.bfloat16)
    b2 = bias.astype(jnp.float32).reshape(E, 1)

    # --- batch blocking -------------------------------------------------------
    tb_max = max(128, (tb_max // 128) * 128)       # clamp to a 128 multiple
    B_pad = _round_up(B, 128)                      # lane rounding only
    TB = _pick_tb(B_pad, tb_max)                   # TB divides B_pad exactly
    if B_pad != B:
        x_lc = jnp.pad(x_lc, ((0, 0), (0, B_pad - B)))
    # TODO(synk): for tiny B (< 128) a plain-XLA path avoids the padded-lane
    # DMA waste; kept on the kernel path here so the demo exercises Pallas.

    out_eb = pl.pallas_call(
        functools.partial(_cnn_kernel, C=C, K=K),
        out_shape=jax.ShapeDtypeStruct((E, B_pad), jnp.float32),
        grid_spec=pltpu.PrefetchScalarGridSpec(
            num_scalar_prefetch=0,
            grid=(B_pad // TB,),
            in_specs=[
                pl.BlockSpec((L * C, TB), lambda b: (0, b)),
                pl.BlockSpec((E, KC), lambda b: (0, 0)),
                pl.BlockSpec((E, 1), lambda b: (0, 0)),
            ],
            out_specs=pl.BlockSpec((E, TB), lambda b: (0, b)),
        ),
        compiler_params=pltpu.CompilerParams(
            dimension_semantics=("parallel",)
        ),
    )(x_lc, w2, b2)

    # Lane-dense (E, B_pad) -> (B, E)
    return out_eb[:, :B].T


def cnn_reference(x, weight, bias):
    """Pure-JAX f32 reference matching PyTorch semantics."""
    B, C, L = x.shape
    E, _, K = weight.shape
    Lout = L - K + 1
    windows = jnp.stack([x[:, :, k:k + Lout] for k in range(K)], axis=-1)  # (B,C,Lout,K)
    conv = jnp.einsum("bclk,eck->bel", windows, weight) + bias[None, :, None]
    return jnp.max(jax.nn.relu(conv), axis=2)  # (B, E)


if __name__ == "__main__":
    # Small shapes consistent with the module: mWord=16, eChar=8, eWord=16, batch=2.
    mWord, eChar, eWord, batch = 16, 8, 16, 2

    key = jax.random.PRNGKey(0)
    kx, kw, kb = jax.random.split(key, 3)
    x = jax.random.normal(kx, (batch, eChar, mWord), dtype=jnp.float32)
    # Deterministic parameter init (shapes follow nn.Conv1d(eChar, eWord, 5)).
    weight = jax.random.normal(kw, (eWord, eChar, 5), dtype=jnp.float32) * 0.1
    bias = jax.random.normal(kb, (eWord,), dtype=jnp.float32) * 0.1

    out = cnn_forward(x, weight, bias)
    out = jax.block_until_ready(out)

    ref = cnn_reference(x, weight, bias)
    assert out.shape == (batch, eWord)
    # bf16 kernel inputs vs f32 reference -> slightly loosened tolerance.
    assert jnp.allclose(out, ref, atol=2e-2, rtol=2e-2), "mismatch vs reference"

    print("KERNEL_OK")
</pallas_src>

<mosaic_0001>
module attributes {stable_mosaic.version = 11 : i64} {
  func.func @_cnn_kernel(%arg0: i32, %arg1: memref<128x128xbf16, #tpu.memory_space<vmem>>, %arg2: memref<16x40xbf16, #tpu.memory_space<vmem>>, %arg3: memref<16x1xf32, #tpu.memory_space<vmem>>, %arg4: memref<16x128xf32, #tpu.memory_space<vmem>>) attributes {dimension_semantics = [#tpu.dimension_semantics<parallel>], iteration_bounds = array<i64: 1>, scalar_prefetch = 0 : i64, scratch_operands = 0 : i64, tpu.core_type = #tpu.core_type<tc>, window_params = [{transform_indices = @transform_0, window_bounds = array<i64: 128, 128>}, {pipeline_mode = #tpu.pipeline_mode<synchronous>, transform_indices = @transform_1, window_bounds = array<i64: 16, 40>}, {pipeline_mode = #tpu.pipeline_mode<synchronous>, transform_indices = @transform_2, window_bounds = array<i64: 16, 1>}, {transform_indices = @transform_3, window_bounds = array<i64: 16, 128>}]} {
    %c0 = arith.constant 0 : index
    %c0_0 = arith.constant 0 : index
    %0 = vector.load %arg2[%c0, %c0_0] : memref<16x40xbf16, #tpu.memory_space<vmem>>, vector<16x40xbf16>
    %c0_1 = arith.constant 0 : index
    %c0_2 = arith.constant 0 : index
    %1 = vector.load %arg1[%c0_1, %c0_2] : memref<128x128xbf16, #tpu.memory_space<vmem>>, vector<40x128xbf16>
    %cst = arith.constant dense<0.000000e+00> : vector<16x128xf32>
    %2 = tpu.matmul %0, %1, %cst {dimension_numbers = #tpu.dot_dimension_numbers<[1], [0], [0], [1], [0, 0, 1, 1], [], []>} : vector<16x40xbf16>, vector<40x128xbf16>, vector<16x128xf32> -> vector<16x128xf32>
    %c8 = arith.constant 8 : index
    %c0_3 = arith.constant 0 : index
    %3 = vector.load %arg1[%c8, %c0_3] : memref<128x128xbf16, #tpu.memory_space<vmem>>, vector<40x128xbf16>
    %cst_4 = arith.constant dense<0.000000e+00> : vector<16x128xf32>
    %4 = tpu.matmul %0, %3, %cst_4 {dimension_numbers = #tpu.dot_dimension_numbers<[1], [0], [0], [1], [0, 0, 1, 1], [], []>} : vector<16x40xbf16>, vector<40x128xbf16>, vector<16x128xf32> -> vector<16x128xf32>
    %5 = arith.maximumf %2, %4 : vector<16x128xf32>
    %c16 = arith.constant 16 : index
    %c0_5 = arith.constant 0 : index
    %6 = vector.load %arg1[%c16, %c0_5] : memref<128x128xbf16, #tpu.memory_space<vmem>>, vector<40x128xbf16>
    %cst_6 = arith.constant dense<0.000000e+00> : vector<16x128xf32>
    %7 = tpu.matmul %0, %6, %cst_6 {dimension_numbers = #tpu.dot_dimension_numbers<[1], [0], [0], [1], [0, 0, 1, 1], [], []>} : vector<16x40xbf16>, vector<40x128xbf16>, vector<16x128xf32> -> vector<16x128xf32>
    %8 = arith.maximumf %5, %7 : vector<16x128xf32>
    %c24 = arith.constant 24 : index
    %c0_7 = arith.constant 0 : index
    %9 = vector.load %arg1[%c24, %c0_7] : memref<128x128xbf16, #tpu.memory_space<vmem>>, vector<40x128xbf16>
    %cst_8 = arith.constant dense<0.000000e+00> : vector<16x128xf32>
    %10 = tpu.matmul %0, %9, %cst_8 {dimension_numbers = #tpu.dot_dimension_numbers<[1], [0], [0], [1], [0, 0, 1, 1], [], []>} : vector<16x40xbf16>, vector<40x128xbf16>, vector<16x128xf32> -> vector<16x128xf32>
    %11 = arith.maximumf %8, %10 : vector<16x128xf32>
    %c32 = arith.constant 32 : index
    %c0_9 = arith.constant 0 : index
    %12 = vector.load %arg1[%c32, %c0_9] : memref<128x128xbf16, #tpu.memory_space<vmem>>, vector<40x128xbf16>
    %cst_10 = arith.constant dense<0.000000e+00> : vector<16x128xf32>
    %13 = tpu.matmul %0, %12, %cst_10 {dimension_numbers = #tpu.dot_dimension_numbers<[1], [0], [0], [1], [0, 0, 1, 1], [], []>} : vector<16x40xbf16>, vector<40x128xbf16>, vector<16x128xf32> -> vector<16x128xf32>
    %14 = arith.maximumf %11, %13 : vector<16x128xf32>
    %c40 = arith.constant 40 : index
    %c0_11 = arith.constant 0 : index
    %15 = vector.load %arg1[%c40, %c0_11] : memref<128x128xbf16, #tpu.memory_space<vmem>>, vector<40x128xbf16>
    %cst_12 = arith.constant dense<0.000000e+00> : vector<16x128xf32>
    %16 = tpu.matmul %0, %15, %cst_12 {dimension_numbers = #tpu.dot_dimension_numbers<[1], [0], [0], [1], [0, 0, 1, 1], [], []>} : vector<16x40xbf16>, vector<40x128xbf16>, vector<16x128xf32> -> vector<16x128xf32>
    %17 = arith.maximumf %14, %16 : vector<16x128xf32>
    %c48 = arith.constant 48 : index
    %c0_13 = arith.constant 0 : index
    %18 = vector.load %arg1[%c48, %c0_13] : memref<128x128xbf16, #tpu.memory_space<vmem>>, vector<40x128xbf16>
    %cst_14 = arith.constant dense<0.000000e+00> : vector<16x128xf32>
    %19 = tpu.matmul %0, %18, %cst_14 {dimension_numbers = #tpu.dot_dimension_numbers<[1], [0], [0], [1], [0, 0, 1, 1], [], []>} : vector<16x40xbf16>, vector<40x128xbf16>, vector<16x128xf32> -> vector<16x128xf32>
    %20 = arith.maximumf %17, %19 : vector<16x128xf32>
    %c56 = arith.constant 56 : index
    %c0_15 = arith.constant 0 : index
    %21 = vector.load %arg1[%c56, %c0_15] : memref<128x128xbf16, #tpu.memory_space<vmem>>, vector<40x128xbf16>
    %cst_16 = arith.constant dense<0.000000e+00> : vector<16x128xf32>
    %22 = tpu.matmul %0, %21, %cst_16 {dimension_numbers = #tpu.dot_dimension_numbers<[1], [0], [0], [1], [0, 0, 1, 1], [], []>} : vector<16x40xbf16>, vector<40x128xbf16>, vector<16x128xf32> -> vector<16x128xf32>
    %23 = arith.maximumf %20, %22 : vector<16x128xf32>
    %c64 = arith.constant 64 : index
    %c0_17 = arith.constant 0 : index
    %24 = vector.load %arg1[%c64, %c0_17] : memref<128x128xbf16, #tpu.memory_space<vmem>>, vector<40x128xbf16>
    %cst_18 = arith.constant dense<0.000000e+00> : vector<16x128xf32>
    %25 = tpu.matmul %0, %24, %cst_18 {dimension_numbers = #tpu.dot_dimension_numbers<[1], [0], [0], [1], [0, 0, 1, 1], [], []>} : vector<16x40xbf16>, vector<40x128xbf16>, vector<16x128xf32> -> vector<16x128xf32>
    %26 = arith.maximumf %23, %25 : vector<16x128xf32>
    %c72 = arith.constant 72 : index
    %c0_19 = arith.constant 0 : index
    %27 = vector.load %arg1[%c72, %c0_19] : memref<128x128xbf16, #tpu.memory_space<vmem>>, vector<40x128xbf16>
    %cst_20 = arith.constant dense<0.000000e+00> : vector<16x128xf32>
    %28 = tpu.matmul %0, %27, %cst_20 {dimension_numbers = #tpu.dot_dimension_numbers<[1], [0], [0], [1], [0, 0, 1, 1], [], []>} : vector<16x40xbf16>, vector<40x128xbf16>, vector<16x128xf32> -> vector<16x128xf32>
    %29 = arith.maximumf %26, %28 : vector<16x128xf32>
    %c80 = arith.constant 80 : index
    %c0_21 = arith.constant 0 : index
    %30 = vector.load %arg1[%c80, %c0_21] : memref<128x128xbf16, #tpu.memory_space<vmem>>, vector<40x128xbf16>
    %cst_22 = arith.constant dense<0.000000e+00> : vector<16x128xf32>
    %31 = tpu.matmul %0, %30, %cst_22 {dimension_numbers = #tpu.dot_dimension_numbers<[1], [0], [0], [1], [0, 0, 1, 1], [], []>} : vector<16x40xbf16>, vector<40x128xbf16>, vector<16x128xf32> -> vector<16x128xf32>
    %32 = arith.maximumf %29, %31 : vector<16x128xf32>
    %c88 = arith.constant 88 : index
    %c0_23 = arith.constant 0 : index
    %33 = vector.load %arg1[%c88, %c0_23] : memref<128x128xbf16, #tpu.memory_space<vmem>>, vector<40x128xbf16>
    %cst_24 = arith.constant dense<0.000000e+00> : vector<16x128xf32>
    %34 = tpu.matmul %0, %33, %cst_24 {dimension_numbers = #tpu.dot_dimension_numbers<[1], [0], [0], [1], [0, 0, 1, 1], [], []>} : vector<16x40xbf16>, vector<40x128xbf16>, vector<16x128xf32> -> vector<16x128xf32>
    %35 = arith.maximumf %32, %34 : vector<16x128xf32>
    %c0_25 = arith.constant 0 : index
    %c0_26 = arith.constant 0 : index
    %36 = vector.load %arg3[%c0_25, %c0_26] : memref<16x1xf32, #tpu.memory_space<vmem>>, vector<16x1xf32>
    %37 = vector.broadcast %36 : vector<16x1xf32> to vector<16x128xf32>
    %38 = arith.addf %35, %37 : vector<16x128xf32>
    %cst_27 = arith.constant 0.000000e+00 : f32
    %39 = vector.broadcast %cst_27 : f32 to vector<16x128xf32>
    %40 = arith.maximumf %38, %39 : vector<16x128xf32>
    %c0_28 = arith.constant 0 : index
    %c0_29 = arith.constant 0 : index
    %41 = vector.load %arg4[%c0_28, %c0_29] : memref<16x128xf32, #tpu.memory_space<vmem>>, vector<16x128xf32>
    tpu.vector_store %arg4[%c0_28, %c0_29], %40 {strides = array<i32>} : memref<16x128xf32, #tpu.memory_space<vmem>>, vector<16x128xf32>,
    return
  }
  func.func @transform_0(%arg0: i32) -> (i32, i32) {
    %c0_i32 = arith.constant 0 : i32
    %c0_i32_0 = arith.constant 0 : i32
    return %c0_i32, %arg0 : i32, i32
  }
  func.func @transform_1(%arg0: i32) -> (i32, i32) {
    %c0_i32 = arith.constant 0 : i32
    %c0_i32_0 = arith.constant 0 : i32
    %c0_i32_1 = arith.constant 0 : i32
    return %c0_i32, %c0_i32_0 : i32, i32
  }
  func.func @transform_2(%arg0: i32) -> (i32, i32) {
    %c0_i32 = arith.constant 0 : i32
    %c0_i32_0 = arith.constant 0 : i32
    %c0_i32_1 = arith.constant 0 : i32
    return %c0_i32, %c0_i32_0 : i32, i32
  }
  func.func @transform_3(%arg0: i32) -> (i32, i32) {
    %c0_i32 = arith.constant 0 : i32
    %c0_i32_0 = arith.constant 0 : i32
    return %c0_i32, %arg0 : i32, i32
  }
}

</mosaic_0001>

<llo_original>
// kernel: tpu_custom_call.1
$region0: #{tpu_custom_call.1}
  #allocation0 [shape = 'u32[]', space=smem, size = 0x4, offset = 0x4, fixed_abs, tag = 'smem constant byte address 0x4 - core index']
  #allocation1 [shape = 'u32[72,128]{1,0:T(1,128)}', space=vmem, size = 0x9000, scoped, tag = 'internal scratch']
  %s0 = inlined_call_operand.hbm [shape: bf16[128,128], index: 0, kind: input, shape index: {}]
  %s1 = inlined_call_operand.vmem [shape: bf16[16,40], index: 1, kind: input, shape index: {}]
  %s2 = inlined_call_operand.vmem [shape: f32[16,1], index: 2, kind: input, shape index: {}]
  %s3 = inlined_call_operand.hbm [shape: f32[16,128], index: 3, kind: output, shape index: {}]
  %s4 = sld [smem:[#allocation0]]
  $region26: #{tpu_custom_call.1} parent=0
    _
  %s6 = ssub.s32 1, %s4
  %s7 = scalar_select 0, %s6, %s4
  $region1: #{tpu_custom_call.1} parent=0
    #allocation2 [shape = 'u8[32768]{0}', space=vmem, size = 0x8000, scoped, tag = 'input window, operand 0, single buffered']
    #allocation3 [shape = 's32[1]{0}', space=sflag, size = 0x4, scoped, tag = 'scoped memory for tpu_custom_call.1']
    #allocation4 [shape = 's32[1]{0}', space=sflag, size = 0x4, scoped, tag = 'scoped memory for tpu_custom_call.1']
    #allocation5 [shape = 'u8[8192]{0}', space=vmem, size = 0x2000, scoped, tag = 'output window, operand 0, single buffered']
    %8 = vsyncpa [#allocation3], 0
    %9 = vsyncpa [#allocation4], 0
    // Predicated region
    $region2: #{tpu_custom_call.1} parent=1 // pred_check
      _
    $region3: #{tpu_custom_call.1} parent=1 // pred_check_branch
      %11 = sbr.rel (0) target = $region5
    $region4: #{tpu_custom_call.1} parent=1 // pred_region
      %13 = vsyncadd [#allocation3], 0
      %s14 = sshll.u32 %s0, 4
      %s15 = int_to_ptr.hbm [resolvable:$true] %s14
      %s16 = sshll.u32 [#allocation2], 4
      %s17 = int_to_ptr.vmem [resolvable:$true] %s16
      %22 = dma.hbm_to_vmem [thread:$0]  %s15, 1024, %s17, [#allocation3], 64, 64, 4
    $region5: #{tpu_custom_call.1} parent=1 // pred_fallthru
      _
    // Predicated region
    $region6: #{tpu_custom_call.1} parent=1 // pred_check
      _
    $region7: #{tpu_custom_call.1} parent=1 // pred_check_branch
      %24 = sbr.rel (0) target = $region9
    $region8: #{tpu_custom_call.1} parent=1 // pred_region
      _
    $region9: #{tpu_custom_call.1} parent=1 // pred_fallthru
      _
    // Predicated region
    $region10: #{tpu_custom_call.1} parent=1 // pred_check
      _
    $region11: #{tpu_custom_call.1} parent=1 // pred_check_branch
      %26 = sbr.rel (0) target = $region13
    $region12: #{tpu_custom_call.1} parent=1 // pred_region
      _
    $region13: #{tpu_custom_call.1} parent=1 // pred_fallthru
      _
    // Predicated region
    $region14: #{tpu_custom_call.1} parent=1 // pred_check
      _
    $region15: #{tpu_custom_call.1} parent=1 // pred_check_branch
      %28 = sbr.rel (0) target = $region17
    $region16: #{tpu_custom_call.1} parent=1 // pred_region
      %30 = dma.done [#allocation3], 1024
    $region17: #{tpu_custom_call.1} parent=1 // pred_fallthru
      _
    %v32 = vld [vmem:[%s1] sm:$0xf]
    %v33 = vld [vmem:[%s1 + $0x4] sm:$0xf]
    %v34 = vld [vmem:[#allocation2] sm:$0xf]
    %v35 = vld [vmem:[#allocation2 + $0x4] sm:$0xf]
    %v36 = vld [vmem:[#allocation2 + $0x8] sm:$0xf]
    %v37 = vld [vmem:[#allocation2 + $0xc] sm:$0xf]
    %v38 = vld [vmem:[#allocation2 + $0x10] sm:$0xf]
    %v41 = vunpack.c.l.b16 %v32
    %v42 = vunpack.c.l.b16 %v33
    %v43 = vpack.c.b16 %v42, %v41
    %v49 = vunpack.c.l.b16 %v34
    %v50 = vunpack.c.l.b16 %v35
    %v51 = vunpack.c.l.b16 %v36
    %v52 = vunpack.c.l.b16 %v37
    %v53 = vunpack.c.l.b16 %v38
    %v54 = vpack.c.b16 %v50, %v49
    %v55 = vpack.c.b16 %v52, %v51
    %v56 = vpack.c.b16 %v53, %v53
    %vm59 = vcmask 326656
    %v61 = vsel %vm59, %v43, 0
    %vm63 = vcmask 1043456
    %v65 = vsel %vm63, %v56, 0
    %67 = vmatpush.bf16.msra.mxu0 0
    %68 = vmatpush.bf16.msra.mxu0 0
    %69 = vmatpush.bf16.msra.mxu0 0
    %70 = vmatpush.bf16.msra.mxu0 0
    %71 = vmatpush.bf16.msra.mxu0 0
    %72 = vmatpush.bf16.msra.mxu0 %v65
    %73 = vmatpush.bf16.msra.mxu0 %v55
    %74 = vmatpush.bf16.msra.mxu0 %v54
    %75 = vmatmul.bf16.gmra.mxu0 %v61
    %v76 = vpop.f32.mrf.mxu0
    %v77 = vadd.f32 0.0, %v76
    %v78 = vpop.f32.mrf.mxu0
    %v79 = vadd.f32 0.0, %v78
    %80 = vdwg.mxu0
    %v81 = vld [vmem:[#allocation2 + $0x4] sm:$0xf]
    %v82 = vld [vmem:[#allocation2 + $0x8] sm:$0xf]
    %v83 = vld [vmem:[#allocation2 + $0xc] sm:$0xf]
    %v84 = vld [vmem:[#allocation2 + $0x10] sm:$0xf]
    %v85 = vld [vmem:[#allocation2 + $0x14] sm:$0xf]
    %v91 = vunpack.c.l.b16 %v81
    %v92 = vunpack.c.l.b16 %v82
    %v93 = vunpack.c.l.b16 %v83
    %v94 = vunpack.c.l.b16 %v84
    %v95 = vunpack.c.l.b16 %v85
    %v96 = vpack.c.b16 %v92, %v91
    %v97 = vpack.c.b16 %v94, %v93
    %v98 = vpack.c.b16 %v95, %v95
    %v102 = vsel %vm63, %v98, 0
    %104 = vmatpush.bf16.msra.mxu0 0
    %105 = vmatpush.bf16.msra.mxu0 0
    %106 = vmatpush.bf16.msra.mxu0 0
    %107 = vmatpush.bf16.msra.mxu0 0
    %108 = vmatpush.bf16.msra.mxu0 0
    %109 = vmatpush.bf16.msra.mxu0 %v102
    %110 = vmatpush.bf16.msra.mxu0 %v97
    %111 = vmatpush.bf16.msra.mxu0 %v96
    %112 = vmatmul.bf16.gmra.mxu0 %v61
    %v113 = vpop.f32.mrf.mxu0
    %v114 = vadd.f32 0.0, %v113
    %v115 = vpop.f32.mrf.mxu0
    %v116 = vadd.f32 0.0, %v115
    %117 = vdwg.mxu0
    %v118 = vmax.f32 %v77, %v114
    %v119 = vmax.f32 %v79, %v116
    %v120 = vld [vmem:[#allocation2 + $0x8] sm:$0xf]
    %v121 = vld [vmem:[#allocation2 + $0xc] sm:$0xf]
    %v122 = vld [vmem:[#allocation2 + $0x10] sm:$0xf]
    %v123 = vld [vmem:[#allocation2 + $0x14] sm:$0xf]
    %v124 = vld [vmem:[#allocation2 + $0x18] sm:$0xf]
    %v130 = vunpack.c.l.b16 %v120
    %v131 = vunpack.c.l.b16 %v121
    %v132 = vunpack.c.l.b16 %v122
    %v133 = vunpack.c.l.b16 %v123
    %v134 = vunpack.c.l.b16 %v124
    %v135 = vpack.c.b16 %v131, %v130
    %v136 = vpack.c.b16 %v133, %v132
    %v137 = vpack.c.b16 %v134, %v134
    %v141 = vsel %vm63, %v137, 0
    %143 = vmatpush.bf16.msra.mxu0 0
    %144 = vmatpush.bf16.msra.mxu0 0
    %145 = vmatpush.bf16.msra.mxu0 0
    %146 = vmatpush.bf16.msra.mxu0 0
    %147 = vmatpush.bf16.msra.mxu0 0
    %148 = vmatpush.bf16.msra.mxu0 %v141
    %149 = vmatpush.bf16.msra.mxu0 %v136
    %150 = vmatpush.bf16.msra.mxu0 %v135
    %151 = vmatmul.bf16.gmra.mxu0 %v61
    %v152 = vpop.f32.mrf.mxu0
    %v153 = vadd.f32 0.0, %v152
    %v154 = vpop.f32.mrf.mxu0
    %v155 = vadd.f32 0.0, %v154
    %156 = vdwg.mxu0
    %v157 = vmax.f32 %v118, %v153
    %v158 = vmax.f32 %v119, %v155
    %v159 = vld [vmem:[#allocation2 + $0xc] sm:$0xf]
    %v160 = vld [vmem:[#allocation2 + $0x10] sm:$0xf]
    %v161 = vld [vmem:[#allocation2 + $0x14] sm:$0xf]
    %v162 = vld [vmem:[#allocation2 + $0x18] sm:$0xf]
    %v163 = vld [vmem:[#allocation2 + $0x1c] sm:$0xf]
    %v169 = vunpack.c.l.b16 %v159
    %v170 = vunpack.c.l.b16 %v160
    %v171 = vunpack.c.l.b16 %v161
    %v172 = vunpack.c.l.b16 %v162
    %v173 = vunpack.c.l.b16 %v163
    %v174 = vpack.c.b16 %v170, %v169
    %v175 = vpack.c.b16 %v172, %v171
    %v176 = vpack.c.b16 %v173, %v173
    %v180 = vsel %vm63, %v176, 0
    %182 = vmatpush.bf16.msra.mxu0 0
    %183 = vmatpush.bf16.msra.mxu0 0
    %184 = vmatpush.bf16.msra.mxu0 0
    %185 = vmatpush.bf16.msra.mxu0 0
    %186 = vmatpush.bf16.msra.mxu0 0
    %187 = vmatpush.bf16.msra.mxu0 %v180
    %188 = vmatpush.bf16.msra.mxu0 %v175
    %189 = vmatpush.bf16.msra.mxu0 %v174
    %190 = vmatmul.bf16.gmra.mxu0 %v61
    %v191 = vpop.f32.mrf.mxu0
    %v192 = vadd.f32 0.0, %v191
    %v193 = vpop.f32.mrf.mxu0
    %v194 = vadd.f32 0.0, %v193
    %195 = vdwg.mxu0
    %v196 = vmax.f32 %v157, %v192
    %v197 = vmax.f32 %v158, %v194
    %v198 = vld [vmem:[#allocation2 + $0x10] sm:$0xf]
    %v199 = vld [vmem:[#allocation2 + $0x14] sm:$0xf]
    %v200 = vld [vmem:[#allocation2 + $0x18] sm:$0xf]
    %v201 = vld [vmem:[#allocation2 + $0x1c] sm:$0xf]
    %v202 = vld [vmem:[#allocation2 + $0x20] sm:$0xf]
    %v208 = vunpack.c.l.b16 %v198
    %v209 = vunpack.c.l.b16 %v199
    %v210 = vunpack.c.l.b16 %v200
    %v211 = vunpack.c.l.b16 %v201
    %v212 = vunpack.c.l.b16 %v202
    %v213 = vpack.c.b16 %v209, %v208
    %v214 = vpack.c.b16 %v211, %v210
    %v215 = vpack.c.b16 %v212, %v212
    %v219 = vsel %vm63, %v215, 0
    %221 = vmatpush.bf16.msra.mxu0 0
    %222 = vmatpush.bf16.msra.mxu0 0
    %223 = vmatpush.bf16.msra.mxu0 0
    %224 = vmatpush.bf16.msra.mxu0 0
    %225 = vmatpush.bf16.msra.mxu0 0
    %226 = vmatpush.bf16.msra.mxu0 %v219
    %227 = vmatpush.bf16.msra.mxu0 %v214
    %228 = vmatpush.bf16.msra.mxu0 %v213
    %229 = vmatmul.bf16.gmra.mxu0 %v61
    %v230 = vpop.f32.mrf.mxu0
    %v231 = vadd.f32 0.0, %v230
    %v232 = vpop.f32.mrf.mxu0
    %v233 = vadd.f32 0.0, %v232
    %234 = vdwg.mxu0
    %v235 = vmax.f32 %v196, %v231
    %v236 = vmax.f32 %v197, %v233
    %v237 = vld [vmem:[#allocation2 + $0x14] sm:$0xf]
    %v238 = vld [vmem:[#allocation2 + $0x18] sm:$0xf]
    %v239 = vld [vmem:[#allocation2 + $0x1c] sm:$0xf]
    %v240 = vld [vmem:[#allocation2 + $0x20] sm:$0xf]
    %v241 = vld [vmem:[#allocation2 + $0x24] sm:$0xf]
    %v247 = vunpack.c.l.b16 %v237
    %v248 = vunpack.c.l.b16 %v238
    %v249 = vunpack.c.l.b16 %v239
    %v250 = vunpack.c.l.b16 %v240
    %v251 = vunpack.c.l.b16 %v241
    %v252 = vpack.c.b16 %v248, %v247
    %v253 = vpack.c.b16 %v250, %v249
    %v254 = vpack.c.b16 %v251, %v251
    %v258 = vsel %vm63, %v254, 0
    %260 = vmatpush.bf16.msra.mxu0 0
    %261 = vmatpush.bf16.msra.mxu0 0
    %262 = vmatpush.bf16.msra.mxu0 0
    %263 = vmatpush.bf16.msra.mxu0 0
    %264 = vmatpush.bf16.msra.mxu0 0
    %265 = vmatpush.bf16.msra.mxu0 %v258
    %266 = vmatpush.bf16.msra.mxu0 %v253
    %267 = vmatpush.bf16.msra.mxu0 %v252
    %268 = vmatmul.bf16.gmra.mxu0 %v61
    %v269 = vpop.f32.mrf.mxu0
    %v270 = vadd.f32 0.0, %v269
    %v271 = vpop.f32.mrf.mxu0
    %v272 = vadd.f32 0.0, %v271
    %273 = vdwg.mxu0
    %v274 = vmax.f32 %v235, %v270
    %v275 = vmax.f32 %v236, %v272
    %v276 = vld [vmem:[#allocation2 + $0x18] sm:$0xf]
    %v277 = vld [vmem:[#allocation2 + $0x1c] sm:$0xf]
    %v278 = vld [vmem:[#allocation2 + $0x20] sm:$0xf]
    %v279 = vld [vmem:[#allocation2 + $0x24] sm:$0xf]
    %v280 = vld [vmem:[#allocation2 + $0x28] sm:$0xf]
    %v286 = vunpack.c.l.b16 %v276
    %v287 = vunpack.c.l.b16 %v277
    %v288 = vunpack.c.l.b16 %v278
    %v289 = vunpack.c.l.b16 %v279
    %v290 = vunpack.c.l.b16 %v280
    %v291 = vpack.c.b16 %v287, %v286
    %v292 = vpack.c.b16 %v289, %v288
    %v293 = vpack.c.b16 %v290, %v290
    %v297 = vsel %vm63, %v293, 0
    %299 = vmatpush.bf16.msra.mxu0 0
    %300 = vmatpush.bf16.msra.mxu0 0
    %301 = vmatpush.bf16.msra.mxu0 0
    %302 = vmatpush.bf16.msra.mxu0 0
    %303 = vmatpush.bf16.msra.mxu0 0
    %304 = vmatpush.bf16.msra.mxu0 %v297
    %305 = vmatpush.bf16.msra.mxu0 %v292
    %306 = vmatpush.bf16.msra.mxu0 %v291
    %307 = vmatmul.bf16.gmra.mxu0 %v61
    %v308 = vpop.f32.mrf.mxu0
    %v309 = vadd.f32 0.0, %v308
    %v310 = vpop.f32.mrf.mxu0
    %v311 = vadd.f32 0.0, %v310
    %312 = vdwg.mxu0
    %v313 = vmax.f32 %v274, %v309
    %v314 = vmax.f32 %v275, %v311
    %v315 = vld [vmem:[#allocation2 + $0x1c] sm:$0xf]
    %v316 = vld [vmem:[#allocation2 + $0x20] sm:$0xf]
    %v317 = vld [vmem:[#allocation2 + $0x24] sm:$0xf]
    %v318 = vld [vmem:[#allocation2 + $0x28] sm:$0xf]
    %v319 = vld [vmem:[#allocation2 + $0x2c] sm:$0xf]
    %v325 = vunpack.c.l.b16 %v315
    %v326 = vunpack.c.l.b16 %v316
    %v327 = vunpack.c.l.b16 %v317
    %v328 = vunpack.c.l.b16 %v318
    %v329 = vunpack.c.l.b16 %v319
    %v330 = vpack.c.b16 %v326, %v325
    %v331 = vpack.c.b16 %v328, %v327
    %v332 = vpack.c.b16 %v329, %v329
    %v336 = vsel %vm63, %v332, 0
    %338 = vmatpush.bf16.msra.mxu0 0
    %339 = vmatpush.bf16.msra.mxu0 0
    %340 = vmatpush.bf16.msra.mxu0 0
    %341 = vmatpush.bf16.msra.mxu0 0
    %342 = vmatpush.bf16.msra.mxu0 0
    %343 = vmatpush.bf16.msra.mxu0 %v336
    %344 = vmatpush.bf16.msra.mxu0 %v331
    %345 = vmatpush.bf16.msra.mxu0 %v330
    %346 = vmatmul.bf16.gmra.mxu0 %v61
    %v347 = vpop.f32.mrf.mxu0
    %v348 = vadd.f32 0.0, %v347
    %v349 = vpop.f32.mrf.mxu0
    %v350 = vadd.f32 0.0, %v349
    %351 = vdwg.mxu0
    %v352 = vmax.f32 %v313, %v348
    %v353 = vmax.f32 %v314, %v350
    %v354 = vld [vmem:[#allocation2 + $0x20] sm:$0xf]
    %v355 = vld [vmem:[#allocation2 + $0x24] sm:$0xf]
    %v356 = vld [vmem:[#allocation2 + $0x28] sm:$0xf]
    %v357 = vld [vmem:[#allocation2 + $0x2c] sm:$0xf]
    %v358 = vld [vmem:[#allocation2 + $0x30] sm:$0xf]
    %v364 = vunpack.c.l.b16 %v354
    %v365 = vunpack.c.l.b16 %v355
    %v366 = vunpack.c.l.b16 %v356
    %v367 = vunpack.c.l.b16 %v357
    %v368 = vunpack.c.l.b16 %v358
    %v369 = vpack.c.b16 %v365, %v364
    %v370 = vpack.c.b16 %v367, %v366
    %v371 = vpack.c.b16 %v368, %v368
    %v375 = vsel %vm63, %v371, 0
    %377 = vmatpush.bf16.msra.mxu0 0
    %378 = vmatpush.bf16.msra.mxu0 0
    %379 = vmatpush.bf16.msra.mxu0 0
    %380 = vmatpush.bf16.msra.mxu0 0
    %381 = vmatpush.bf16.msra.mxu0 0
    %382 = vmatpush.bf16.msra.mxu0 %v375
    %383 = vmatpush.bf16.msra.mxu0 %v370
    %384 = vmatpush.bf16.msra.mxu0 %v369
    %385 = vmatmul.bf16.gmra.mxu0 %v61
    %v386 = vpop.f32.mrf.mxu0
    %v387 = vadd.f32 0.0, %v386
    %v388 = vpop.f32.mrf.mxu0
    %v389 = vadd.f32 0.0, %v388
    %390 = vdwg.mxu0
    %v391 = vmax.f32 %v352, %v387
    %v392 = vmax.f32 %v353, %v389
    %v393 = vld [vmem:[#allocation2 + $0x24] sm:$0xf]
    %v394 = vld [vmem:[#allocation2 + $0x28] sm:$0xf]
    %v395 = vld [vmem:[#allocation2 + $0x2c] sm:$0xf]
    %v396 = vld [vmem:[#allocation2 + $0x30] sm:$0xf]
    %v397 = vld [vmem:[#allocation2 + $0x34] sm:$0xf]
    %v403 = vunpack.c.l.b16 %v393
    %v404 = vunpack.c.l.b16 %v394
    %v405 = vunpack.c.l.b16 %v395
    %v406 = vunpack.c.l.b16 %v396
    %v407 = vunpack.c.l.b16 %v397
    %v408 = vpack.c.b16 %v404, %v403
    %v409 = vpack.c.b16 %v406, %v405
    %v410 = vpack.c.b16 %v407, %v407
    %v414 = vsel %vm63, %v410, 0
    %416 = vmatpush.bf16.msra.mxu0 0
    %417 = vmatpush.bf16.msra.mxu0 0
    %418 = vmatpush.bf16.msra.mxu0 0
    %419 = vmatpush.bf16.msra.mxu0 0
    %420 = vmatpush.bf16.msra.mxu0 0
    %421 = vmatpush.bf16.msra.mxu0 %v414
    %422 = vmatpush.bf16.msra.mxu0 %v409
    %423 = vmatpush.bf16.msra.mxu0 %v408
    %424 = vmatmul.bf16.gmra.mxu0 %v61
    %v425 = vpop.f32.mrf.mxu0
    %v426 = vadd.f32 0.0, %v425
    %v427 = vpop.f32.mrf.mxu0
    %v428 = vadd.f32 0.0, %v427
    %429 = vdwg.mxu0
    %v430 = vmax.f32 %v391, %v426
    %v431 = vmax.f32 %v392, %v428
    %v432 = vld [vmem:[#allocation2 + $0x28] sm:$0xf]
    %v433 = vld [vmem:[#allocation2 + $0x2c] sm:$0xf]
    %v434 = vld [vmem:[#allocation2 + $0x30] sm:$0xf]
    %v435 = vld [vmem:[#allocation2 + $0x34] sm:$0xf]
    %v436 = vld [vmem:[#allocation2 + $0x38] sm:$0xf]
    %v442 = vunpack.c.l.b16 %v432
    %v443 = vunpack.c.l.b16 %v433
    %v444 = vunpack.c.l.b16 %v434
    %v445 = vunpack.c.l.b16 %v435
    %v446 = vunpack.c.l.b16 %v436
    %v447 = vpack.c.b16 %v443, %v442
    %v448 = vpack.c.b16 %v445, %v444
    %v449 = vpack.c.b16 %v446, %v446
    %v453 = vsel %vm63, %v449, 0
    %455 = vmatpush.bf16.msra.mxu0 0
    %456 = vmatpush.bf16.msra.mxu0 0
    %457 = vmatpush.bf16.msra.mxu0 0
    %458 = vmatpush.bf16.msra.mxu0 0
    %459 = vmatpush.bf16.msra.mxu0 0
    %460 = vmatpush.bf16.msra.mxu0 %v453
    %461 = vmatpush.bf16.msra.mxu0 %v448
    %462 = vmatpush.bf16.msra.mxu0 %v447
    %463 = vmatmul.bf16.gmra.mxu0 %v61
    %v464 = vpop.f32.mrf.mxu0
    %v465 = vadd.f32 0.0, %v464
    %v466 = vpop.f32.mrf.mxu0
    %v467 = vadd.f32 0.0, %v466
    %468 = vdwg.mxu0
    %v469 = vmax.f32 %v430, %v465
    %v470 = vmax.f32 %v431, %v467
    %v471 = vld [vmem:[#allocation2 + $0x2c] sm:$0xf]
    %v472 = vld [vmem:[#allocation2 + $0x30] sm:$0xf]
    %v473 = vld [vmem:[#allocation2 + $0x34] sm:$0xf]
    %v474 = vld [vmem:[#allocation2 + $0x38] sm:$0xf]
    %v475 = vld [vmem:[#allocation2 + $0x3c] sm:$0xf]
    %v481 = vunpack.c.l.b16 %v471
    %v482 = vunpack.c.l.b16 %v472
    %v483 = vunpack.c.l.b16 %v473
    %v484 = vunpack.c.l.b16 %v474
    %v485 = vunpack.c.l.b16 %v475
    %v486 = vpack.c.b16 %v482, %v481
    %v487 = vpack.c.b16 %v484, %v483
    %v488 = vpack.c.b16 %v485, %v485
    %v492 = vsel %vm63, %v488, 0
    %494 = vmatpush.bf16.msra.mxu0 0
    %495 = vmatpush.bf16.msra.mxu0 0
    %496 = vmatpush.bf16.msra.mxu0 0
    %497 = vmatpush.bf16.msra.mxu0 0
    %498 = vmatpush.bf16.msra.mxu0 0
    %499 = vmatpush.bf16.msra.mxu0 %v492
    %500 = vmatpush.bf16.msra.mxu0 %v487
    %501 = vmatpush.bf16.msra.mxu0 %v486
    %502 = vmatmul.bf16.gmra.mxu0 %v61
    %v503 = vpop.f32.mrf.mxu0
    %v504 = vadd.f32 0.0, %v503
    %v505 = vpop.f32.mrf.mxu0
    %v506 = vadd.f32 0.0, %v505
    %507 = vdwg.mxu0
    %v508 = vmax.f32 %v469, %v504
    %v509 = vmax.f32 %v470, %v506
    %v510 = vld [vmem:[%s2] sm:$0xff]
    %v511 = vld [vmem:[%s2 + $0x8] sm:$0xff]
    %513 = vset.pattern.permute.xlu0 0
    %514 = vperm.xlu0 %513, %v510
    %v515 = vpop.permute.xlu0 %514
    %518 = vset.pattern.permute.xlu0 0
    %519 = vperm.xlu0 %518, %v511
    %v520 = vpop.permute.xlu0 %519
    %v522 = vadd.f32 %v508, %v515
    %v523 = vadd.f32 %v509, %v520
    %v524 = vmax.f32 %v522, 0.0
    %v525 = vmax.f32 %v523, 0.0
    %526 = vst [vmem:[#allocation5] sm:$0xff] %v524
    %527 = vst [vmem:[#allocation5 + $0x8] sm:$0xff] %v525
    // Predicated region
    $region18: #{tpu_custom_call.1} parent=1 // pred_check
      _
    $region19: #{tpu_custom_call.1} parent=1 // pred_check_branch
      %529 = sbr.rel (0) target = $region21
    $region20: #{tpu_custom_call.1} parent=1 // pred_region
      %531 = vsyncadd [#allocation4], 0
      %s532 = sshll.u32 [#allocation5], 4
      %s533 = int_to_ptr.vmem [resolvable:$true] %s532
      %s534 = sshll.u32 %s3, 4
      %s535 = int_to_ptr.hbm [resolvable:$true] %s534
      %540 = dma.vmem_to_hbm [thread:$0]  %s533, 256, %s535, [#allocation4], 128, 128, 8
    $region21: #{tpu_custom_call.1} parent=1 // pred_fallthru
      _
    // Predicated region
    $region22: #{tpu_custom_call.1} parent=1 // pred_check
      _
    $region23: #{tpu_custom_call.1} parent=1 // pred_check_branch
      %542 = sbr.rel (0) target = $region25
    $region24: #{tpu_custom_call.1} parent=1 // pred_region
      %544 = dma.done [#allocation4], 256
    $region25: #{tpu_custom_call.1} parent=1 // pred_fallthru
      _
    %545 = vsyncpa [#allocation3], 1
    %546 = vsyncpa [#allocation4], 1

</llo_original>
